<compile_context>
chip_gen: v7x
topology: tpu7x:2x2x1
jax: 0.10.0
libtpu: 0.0.40
codegen_flags: <defaults>
</compile_context>

<pallas_src>
import functools

import jax
import jax.numpy as jnp
from jax.experimental import pallas as pl
from jax.experimental.pallas import tpu as pltpu


def _round_up(x, m):
    return (x + m - 1) // m * m


def _pick_tile(n_pad, cap):
    """Largest power-of-two tile (>=128) dividing n_pad and not above cap."""
    for t in (1024, 512, 256, 128):
        if t <= cap and n_pad % t == 0:
            return t
    return 128


# ----------------------- Kernel 1: fused projection ------------------------ #
def _project_kernel(x_ref, w_ref, wh_ref, f_ref):
    # x_ref: (TQP, F_in), w_ref: (F_in, Dpad+128)
    res = jnp.dot(x_ref[...], w_ref[...], preferred_element_type=jnp.float32)
    d_pad = wh_ref.shape[1]
    wh_ref[...] = res[:, :d_pad].astype(wh_ref.dtype)    # value stream (bf16)
    f_ref[...] = res[:, d_pad:]                          # F1|F2 biases (f32)


# ------------------ Kernel 2: fused multi-head attention ------------------- #
def _gat_attention_kernel(f1_ref, f2t_ref, wh_ref, adj_ref, out_ref,
                          m_ref, l_ref, acc_ref, *,
                          alpha, apply_elu, num_heads, d_head, d_pad):
    k = pl.program_id(1)

    @pl.when(k == 0)
    def _init():
        m_ref[...] = jnp.full_like(m_ref, -jnp.inf)
        l_ref[...] = jnp.zeros_like(l_ref)
        acc_ref[...] = jnp.zeros_like(acc_ref)

    f1 = f1_ref[...]                    # (TQ, H)   row bias Wh_i.a1   (f32)
    f2t = f2t_ref[...]                  # (H, TK)   col bias Wh_j.a2   (f32)
    wh = wh_ref[...]                    # (TK, Dpad) value stream (bf16)
    tq_blk = f1.shape[0]

    # Additive adjacency-mask bias, hoisted out of the head loop.  Numerically
    # equivalent to where(adj>0, e, -1e6) for every row with >=1 neighbour
    # (masked entries underflow to 0 after the running-max subtraction).
    bias = jnp.where(adj_ref[...] != 0, 0.0, -1000000.0)        # (TQ, TK)

    # Head id of every output column (padded columns get ids >= num_heads).
    out_head = jax.lax.broadcasted_iota(jnp.int32, (1, d_pad), 1) // d_head

    # One-hot head-expansion matrix E: (HP, Dpad), row h -> 1 on head-h columns.
    # Contraction dim padded to 8 so the (TQ,HP)@(HP,Dpad) expansions are
    # comfortable MXU matmuls.
    hp = _round_up(max(num_heads, 1), 8)
    col_head = jax.lax.broadcasted_iota(jnp.int32, (hp, d_pad), 1) // d_head
    row_head = jax.lax.broadcasted_iota(jnp.int32, (hp, d_pad), 0)
    expand = jnp.where((col_head == row_head) & (row_head < num_heads), 1.0, 0.0)

    # TODO(synk): for large H, batch the score pipeline into one (H,TQ,TK) pass;
    # at H<=2 the static unroll below is cheap.
    pv = jnp.zeros((tq_blk, d_pad), jnp.float32)
    scale_cols = []
    for h in range(num_heads):          # static unroll; H is small
        s = f1[:, h:h + 1] + f2t[h:h + 1, :]             # (TQ, TK)
        s = jnp.where(s > 0, s, alpha * s) + bias        # LeakyReLU + mask bias

        m_old = m_ref[h]                                 # (TQ, 1)
        m_new = jnp.maximum(m_old, jnp.max(s, axis=1, keepdims=True))
        p = jnp.exp(s - m_new)                           # masked entries -> 0.0
        scale = jnp.exp(m_old - m_new)                   # (TQ, 1)
        l_ref[h] = scale * l_ref[h] + jnp.sum(p, axis=1, keepdims=True)
        m_ref[h] = m_new
        scale_cols.append(scale)

        # TODO(synk): F.dropout on the attention weights skipped (eval mode).
        # Full-width lane-dense PV matmul; head-h output columns selected after
        # (no sub-128-lane Wh slice; zero extra MXU cost since N rounds to 128).
        pvh = jnp.dot(p.astype(wh.dtype), wh, preferred_element_type=jnp.float32)
        pv = pv + jnp.where(out_head == h, pvh, 0.0)

    if hp > num_heads:
        scale_cols.append(jnp.zeros((tq_blk, hp - num_heads), jnp.float32))
    scale_hq = (jnp.concatenate(scale_cols, axis=1)
                if len(scale_cols) > 1 else scale_cols[0])        # (TQ, HP)
    # Expand (TQ,HP) -> (TQ,Dpad) on the MXU instead of concat-of-broadcasts.
    scale_full = jnp.dot(scale_hq, expand, preferred_element_type=jnp.float32)
    acc_ref[...] = scale_full * acc_ref[...] + pv

    @pl.when(k == pl.num_programs(1) - 1)
    def _finalize():
        inv_cols = [pl.reciprocal(l_ref[h], approx=True)          # EUP slot
                    for h in range(num_heads)]
        if hp > num_heads:
            inv_cols.append(jnp.zeros((tq_blk, hp - num_heads), jnp.float32))
        inv_hq = (jnp.concatenate(inv_cols, axis=1)
                  if len(inv_cols) > 1 else inv_cols[0])
        inv_full = jnp.dot(inv_hq, expand, preferred_element_type=jnp.float32)
        vals = acc_ref[...] * inv_full
        if apply_elu:
            # ELU(alpha=1); exp(v)-1 differs from expm1 by <1 ulp(1) (~1.2e-7)
            # and exp has a guaranteed Mosaic lowering.
            vals = jnp.where(vals > 0, vals,
                             jnp.exp(jnp.minimum(vals, 0.0)) - 1.0)
        out_ref[...] = vals.astype(out_ref.dtype)


# --------------------------- per-layer wrapper ------------------------------ #
def _gat_layer(x_pad, adj_i8, Ws, As, *, alpha, apply_elu, tq, tk, tqp,
               value_dtype):
    n_pad, f_in_pad = x_pad.shape
    f_in, d_out = Ws[0].shape
    num_heads = len(Ws)
    d_cat = num_heads * d_out
    d_pad = _round_up(d_cat, 128)            # lane-dense output width
    assert 2 * num_heads <= 128, "too many heads for the fused F1/F2 block"

    # Fold the attention vectors into the projection:  c1 = W@a1, c2 = W@a2.
    w_all = jnp.concatenate(Ws, axis=1)                                    # (F, H*D)
    c1 = jnp.concatenate([W @ a[:d_out] for W, a in zip(Ws, As)], axis=1)  # (F, H)
    c2 = jnp.concatenate([W @ a[d_out:] for W, a in zip(Ws, As)], axis=1)  # (F, H)
    w_full = jnp.zeros((f_in_pad, d_pad + 128), jnp.float32)
    w_full = w_full.at[:f_in, :d_cat].set(w_all)
    w_full = w_full.at[:f_in, d_pad:d_pad + num_heads].set(c1)
    w_full = w_full.at[:f_in, d_pad + num_heads:d_pad + 2 * num_heads].set(c2)

    # Kernel 1: one MXU matmul gives Wh (all heads, value_dtype) and F1/F2 (f32).
    wh, fbias = pl.pallas_call(
        _project_kernel,
        out_shape=(jax.ShapeDtypeStruct((n_pad, d_pad), value_dtype),
                   jax.ShapeDtypeStruct((n_pad, 128), jnp.float32)),
        grid_spec=pltpu.PrefetchScalarGridSpec(
            num_scalar_prefetch=0,
            grid=(n_pad // tqp,),
            in_specs=[pl.BlockSpec((tqp, f_in_pad), lambda i: (i, 0)),
                      pl.BlockSpec((f_in_pad, d_pad + 128), lambda i: (0, 0))],
            out_specs=[pl.BlockSpec((tqp, d_pad), lambda i: (i, 0)),
                       pl.BlockSpec((tqp, 128), lambda i: (i, 0))]),
        compiler_params=pltpu.CompilerParams(
            dimension_semantics=("parallel",)),
    )(x_pad, w_full)

    f1 = fbias[:, :num_heads]                      # (Np, H) f32 row bias
    f2t = fbias[:, num_heads:2 * num_heads].T      # (H, Np) f32 col bias (lane-dense)

    kern = functools.partial(_gat_attention_kernel, alpha=alpha,
                             apply_elu=apply_elu, num_heads=num_heads,
                             d_head=d_out, d_pad=d_pad)

    steps_q = n_pad // tq
    steps_k = n_pad // tk
    vbytes = jnp.dtype(value_dtype).itemsize
    cost = pl.CostEstimate(
        flops=2 * n_pad * n_pad * d_pad * num_heads
              + 12 * n_pad * n_pad * num_heads,
        transcendentals=n_pad * n_pad * num_heads,
        bytes_accessed=(steps_q * n_pad * (d_pad * vbytes + num_heads * 4)  # Wh+F2^T re-streamed per row block
                        + n_pad * n_pad                                     # int8 adjacency
                        + n_pad * num_heads * 4                             # F1
                        + n_pad * d_pad * 4))                               # output

    # Triple-buffer the streamed Wh / adjacency tiles when the k-loop is long
    # enough (hides DMA latency on low-HBM-bandwidth parts, e.g. v5e).
    def _stream_spec(shape, imap):
        if steps_k >= 3:
            return pl.BlockSpec(shape, imap, pipeline_mode=pl.Buffered(3))
        return pl.BlockSpec(shape, imap)

    # Kernel 2: tiled attention with online softmax (accumulator over col axis).
    return pl.pallas_call(
        kern,
        out_shape=jax.ShapeDtypeStruct((n_pad, d_pad), jnp.float32),
        grid_spec=pltpu.PrefetchScalarGridSpec(
            num_scalar_prefetch=0,
            grid=(steps_q, steps_k),
            in_specs=[
                pl.BlockSpec((tq, num_heads), lambda i, k: (i, 0)),    # F1
                pl.BlockSpec((num_heads, tk), lambda i, k: (0, k)),    # F2^T
                _stream_spec((tk, d_pad), lambda i, k: (k, 0)),        # Wh (value_dtype)
                _stream_spec((tq, tk), lambda i, k: (i, k)),           # adj int8
            ],
            out_specs=pl.BlockSpec((tq, d_pad), lambda i, k: (i, 0)),
            scratch_shapes=[pltpu.VMEM((num_heads, tq, 1), jnp.float32),  # m
                            pltpu.VMEM((num_heads, tq, 1), jnp.float32),  # l
                            pltpu.VMEM((tq, d_pad), jnp.float32)]),       # acc
        compiler_params=pltpu.CompilerParams(
            dimension_semantics=("parallel", "arbitrary"),
            # 40 MiB is safe on every generation incl. v7x (64 MiB physical VMEM).
            vmem_limit_bytes=40 * 1024 * 1024),
        cost_estimate=cost,
    )(f1, f2t, wh, adj_i8)


# ------------------------------ GAT forward -------------------------------- #
def gat_forward(features, adj, params, *, alpha, value_dtype=jnp.bfloat16):
    n = features.shape[0]
    # Pad N to a multiple of 128 only, then choose tiles that divide n_pad, so
    # an unlucky N never inflates the O(N^2) attention work by a whole k-tile.
    n_pad = _round_up(n, 128)
    tk = _pick_tile(n_pad, 1024)                         # reduction (col) tile
    # Keep >= 2 row blocks whenever possible so both v7x TensorCores get work.
    tq = _pick_tile(n_pad, 512 if n_pad >= 1024 else max(128, n_pad // 2))
    tqp = _pick_tile(n_pad, 1024 if n_pad >= 2048 else max(128, n_pad // 2))

    x_pad = jnp.pad(features.astype(jnp.float32), ((0, n_pad - n), (0, 0)))
    adj_i8 = jnp.pad((adj > 0).astype(jnp.int8),
                     ((0, n_pad - n), (0, n_pad - n)))

    heads_w = [W for (W, _) in params["heads"]]
    heads_a = [a for (_, a) in params["heads"]]

    # Layer 1: all heads in one kernel pair; head h occupies output columns
    # [h*hidden, (h+1)*hidden), so the torch.cat over heads is implicit.
    h1 = _gat_layer(x_pad, adj_i8, heads_w, heads_a, alpha=alpha,
                    apply_elu=True, tq=tq, tk=tk, tqp=tqp,
                    value_dtype=value_dtype)
    # TODO(synk): F.dropout on the concatenated features skipped (eval mode).

    # Output layer (concat=False).  h1's padded COLUMNS are exact zeros and
    # W_out is zero-row-padded inside _gat_layer; h1's padded ROWS hold finite
    # garbage but are neutralized by the zero adjacency columns and sliced off.
    out_pad = _gat_layer(h1, adj_i8, [params["W_out"]], [params["a_out"]],
                         alpha=alpha, apply_elu=False, tq=tq, tk=tk, tqp=tqp,
                         value_dtype=value_dtype)
    num_output = params["W_out"].shape[1]
    return out_pad[:n, :num_output]


# ------------------------------- params init ------------------------------- #
def xavier_uniform(key, shape, gain):
    fan_in, fan_out = shape[0], shape[1]
    bound = gain * jnp.sqrt(6.0 / (fan_in + fan_out))
    return jax.random.uniform(key, shape, jnp.float32, -bound, bound)


def init_gat_params(key, dim_feature, hidden_size, num_output, num_heads):
    gain = 1.414
    heads = []
    for _ in range(num_heads):
        key, kw, ka = jax.random.split(key, 3)
        heads.append((xavier_uniform(kw, (dim_feature, hidden_size), gain),
                      xavier_uniform(ka, (2 * hidden_size, 1), gain)))
    key, kw, ka = jax.random.split(key, 3)
    W_out = xavier_uniform(kw, (hidden_size * num_heads, num_output), gain)
    a_out = xavier_uniform(ka, (2 * num_output, 1), gain)
    return {"heads": heads, "W_out": W_out, "a_out": a_out}


# --------------------------- pure-JAX reference ----------------------------- #
def _ref_layer(x, adj, W, a, alpha, apply_elu):
    Wh = x @ W
    d = W.shape[1]
    e = Wh @ a[:d, :] + (Wh @ a[d:, :]).T
    e = jnp.where(e > 0, e, alpha * e)
    att = jnp.where(adj > 0, e, -1000000.0)
    att = jax.nn.softmax(att, axis=1)
    vals = att @ Wh
    return jax.nn.elu(vals) if apply_elu else vals


def _ref_forward(features, adj, params, alpha):
    h = jnp.concatenate(
        [_ref_layer(features, adj, W, a, alpha, True)
         for (W, a) in params["heads"]], axis=1)
    return _ref_layer(h, adj, params["W_out"], params["a_out"], alpha, False)


# ---------------------------------- main ------------------------------------ #
if __name__ == "__main__":
    N = 16            # num nodes
    dim_feature = 8
    hidden_size = 8
    num_output = 4
    num_heads = 2
    alpha = 0.2       # LeakyReLU negative slope
    dropout = 0.6     # unused (inference / training=False)

    key = jax.random.PRNGKey(0)
    kp, kf, ka = jax.random.split(key, 3)

    params = init_gat_params(kp, dim_feature, hidden_size, num_output, num_heads)
    features = jax.random.normal(kf, (N, dim_feature), jnp.float32)
    adj = (jax.random.uniform(ka, (N, N)) > 0.5).astype(jnp.float32)
    adj = jnp.maximum(adj, adj.T)                            # symmetric
    adj = jnp.maximum(adj, jnp.eye(N, dtype=jnp.float32))    # self-loops

    ref = _ref_forward(features, adj, params, alpha)

    # f32 value path: tight functional check of the kernel logic.
    out_f32 = gat_forward(features, adj, params, alpha=alpha,
                          value_dtype=jnp.float32)
    out_f32 = jax.block_until_ready(out_f32)
    assert out_f32.shape == (N, num_output)
    assert jnp.allclose(out_f32, ref, atol=2e-3, rtol=2e-3), "f32 path mismatch"

    # Default bf16 value-stream path (halves the dominant HBM stream of the
    # attention kernel); loose sanity bound covering bf16 quantization noise.
    out_bf16 = gat_forward(features, adj, params, alpha=alpha)
    out_bf16 = jax.block_until_ready(out_bf16)
    assert out_bf16.shape == (N, num_output)
    assert jnp.allclose(out_bf16, ref, atol=1e-1, rtol=1e-1), "bf16 path mismatch"

    print("KERNEL_OK")
</pallas_src>

<mosaic_0001>
module attributes {stable_mosaic.version = 11 : i64} {
  func.func @_project_kernel(%arg0: i32, %arg1: memref<128x8xf32, #tpu.memory_space<vmem>>, %arg2: memref<8x256xf32, #tpu.memory_space<vmem>>, %arg3: memref<128x128xf32, #tpu.memory_space<vmem>>, %arg4: memref<128x128xf32, #tpu.memory_space<vmem>>) attributes {dimension_semantics = [#tpu.dimension_semantics<parallel>], iteration_bounds = array<i64: 1>, scalar_prefetch = 0 : i64, scratch_operands = 0 : i64, tpu.core_type = #tpu.core_type<tc>, window_params = [{transform_indices = @transform_0, window_bounds = array<i64: 128, 8>}, {pipeline_mode = #tpu.pipeline_mode<synchronous>, transform_indices = @transform_1, window_bounds = array<i64: 8, 256>}, {transform_indices = @transform_2, window_bounds = array<i64: 128, 128>}, {transform_indices = @transform_3, window_bounds = array<i64: 128, 128>}]} {
    %c0 = arith.constant 0 : index
    %c0_0 = arith.constant 0 : index
    %0 = vector.load %arg1[%c0, %c0_0] : memref<128x8xf32, #tpu.memory_space<vmem>>, vector<128x8xf32>
    %c0_1 = arith.constant 0 : index
    %c0_2 = arith.constant 0 : index
    %1 = vector.load %arg2[%c0_1, %c0_2] : memref<8x256xf32, #tpu.memory_space<vmem>>, vector<8x256xf32>
    %cst = arith.constant dense<0.000000e+00> : vector<128x256xf32>
    %2 = tpu.matmul %0, %1, %cst {dimension_numbers = #tpu.dot_dimension_numbers<[1], [0], [0], [1], [0, 0, 1, 1], [], []>} : vector<128x8xf32>, vector<8x256xf32>, vector<128x256xf32> -> vector<128x256xf32>
    %3 = vector.extract_strided_slice %2 {offsets = [0, 0], sizes = [128, 128], strides = [1, 1]} : vector<128x256xf32> to vector<128x128xf32>
    %c0_3 = arith.constant 0 : index
    %c0_4 = arith.constant 0 : index
    %4 = vector.load %arg3[%c0_3, %c0_4] : memref<128x128xf32, #tpu.memory_space<vmem>>, vector<128x128xf32>
    tpu.vector_store %arg3[%c0_3, %c0_4], %3 {strides = array<i32>} : memref<128x128xf32, #tpu.memory_space<vmem>>, vector<128x128xf32>,
    %5 = vector.extract_strided_slice %2 {offsets = [0, 128], sizes = [128, 128], strides = [1, 1]} : vector<128x256xf32> to vector<128x128xf32>
    %c0_5 = arith.constant 0 : index
    %c0_6 = arith.constant 0 : index
    %6 = vector.load %arg4[%c0_5, %c0_6] : memref<128x128xf32, #tpu.memory_space<vmem>>, vector<128x128xf32>
    tpu.vector_store %arg4[%c0_5, %c0_6], %5 {strides = array<i32>} : memref<128x128xf32, #tpu.memory_space<vmem>>, vector<128x128xf32>,
    return
  }
  func.func @transform_0(%arg0: i32) -> (i32, i32) {
    %c0_i32 = arith.constant 0 : i32
    %c0_i32_0 = arith.constant 0 : i32
    return %arg0, %c0_i32 : i32, i32
  }
  func.func @transform_1(%arg0: i32) -> (i32, i32) {
    %c0_i32 = arith.constant 0 : i32
    %c0_i32_0 = arith.constant 0 : i32
    %c0_i32_1 = arith.constant 0 : i32
    return %c0_i32, %c0_i32_0 : i32, i32
  }
  func.func @transform_2(%arg0: i32) -> (i32, i32) {
    %c0_i32 = arith.constant 0 : i32
    %c0_i32_0 = arith.constant 0 : i32
    return %arg0, %c0_i32 : i32, i32
  }
  func.func @transform_3(%arg0: i32) -> (i32, i32) {
    %c0_i32 = arith.constant 0 : i32
    %c0_i32_0 = arith.constant 0 : i32
    return %arg0, %c0_i32 : i32, i32
  }
}

</mosaic_0001>

<llo_original>
// kernel: tpu_custom_call.1
$region0: #{tpu_custom_call.1}
  #allocation0 [shape = 'u32[]', space=smem, size = 0x4, offset = 0x4, fixed_abs, tag = 'smem constant byte address 0x4 - core index']
  #allocation1 [shape = 'u32[144,128]{1,0:T(1,128)}', space=vmem, size = 0x12000, scoped, tag = 'internal scratch']
  %s0 = inlined_call_operand.vmem [shape: f32[128,8], index: 0, kind: input, shape index: {}]
  %s1 = inlined_call_operand.vmem [shape: f32[8,256], index: 1, kind: input, shape index: {}]
  %s2 = inlined_call_operand.hbm [shape: f32[128,128], index: 2, kind: output, shape index: {0}]
  %s3 = inlined_call_operand.hbm [shape: f32[128,128], index: 3, kind: output, shape index: {1}]
  %4 = xla_tuple %s2, %s3
  %s5 = sld [smem:[#allocation0]]
  $region26: #{tpu_custom_call.1} parent=0
    _
  %s7 = ssub.s32 1, %s5
  %s8 = scalar_select 0, %s7, %s5
  $region1: #{tpu_custom_call.1} parent=0
    #allocation2 [shape = 'u8[65536]{0}', space=vmem, size = 0x10000, scoped, tag = 'output window, operand 0, single buffered']
    #allocation3 [shape = 's32[1]{0}', space=sflag, size = 0x4, scoped, tag = 'scoped memory for tpu_custom_call.1']
    #allocation4 [shape = 'u8[65536]{0}', space=vmem, size = 0x10000, scoped, tag = 'output window, operand 1, single buffered']
    #allocation5 [shape = 's32[1]{0}', space=sflag, size = 0x4, scoped, tag = 'scoped memory for tpu_custom_call.1']
    %9 = vsyncpa [#allocation3], 0
    %10 = vsyncpa [#allocation5], 0
    // Predicated region
    $region2: #{tpu_custom_call.1} parent=1 // pred_check
      _
    $region3: #{tpu_custom_call.1} parent=1 // pred_check_branch
      %12 = sbr.rel (0) target = $region5
    $region4: #{tpu_custom_call.1} parent=1 // pred_region
      _
    $region5: #{tpu_custom_call.1} parent=1 // pred_fallthru
      _
    // Predicated region
    $region6: #{tpu_custom_call.1} parent=1 // pred_check
      _
    $region7: #{tpu_custom_call.1} parent=1 // pred_check_branch
      %14 = sbr.rel (0) target = $region9
    $region8: #{tpu_custom_call.1} parent=1 // pred_region
      _
    $region9: #{tpu_custom_call.1} parent=1 // pred_fallthru
      _
    %v15 = vld [vmem:[%s0] sm:$0xff]
    %v16 = vld [vmem:[%s0 + $0x8] sm:$0xff]
    %v17 = vld [vmem:[%s0 + $0x10] sm:$0xff]
    %v18 = vld [vmem:[%s0 + $0x18] sm:$0xff]
    %v19 = vld [vmem:[%s0 + $0x20] sm:$0xff]
    %v20 = vld [vmem:[%s0 + $0x28] sm:$0xff]
    %v21 = vld [vmem:[%s0 + $0x30] sm:$0xff]
    %v22 = vld [vmem:[%s0 + $0x38] sm:$0xff]
    %v23 = vld [vmem:[%s0 + $0x40] sm:$0xff]
    %v24 = vld [vmem:[%s0 + $0x48] sm:$0xff]
    %v25 = vld [vmem:[%s0 + $0x50] sm:$0xff]
    %v26 = vld [vmem:[%s0 + $0x58] sm:$0xff]
    %v27 = vld [vmem:[%s0 + $0x60] sm:$0xff]
    %v28 = vld [vmem:[%s0 + $0x68] sm:$0xff]
    %v29 = vld [vmem:[%s0 + $0x70] sm:$0xff]
    %v30 = vld [vmem:[%s0 + $0x78] sm:$0xff]
    %v31 = vld [vmem:[%s1] sm:$0xff]
    %v32 = vld [vmem:[%s1 + $0x8] sm:$0xff]
    %vm33 = vcmask 64512
    %v35 = vsel %vm33, %v15, 0
    %v38 = vsel %vm33, %v16, 0
    %v41 = vsel %vm33, %v17, 0
    %v44 = vsel %vm33, %v18, 0
    %v47 = vsel %vm33, %v19, 0
    %v50 = vsel %vm33, %v20, 0
    %v53 = vsel %vm33, %v21, 0
    %v56 = vsel %vm33, %v22, 0
    %v59 = vsel %vm33, %v23, 0
    %v62 = vsel %vm33, %v24, 0
    %v65 = vsel %vm33, %v25, 0
    %v68 = vsel %vm33, %v26, 0
    %v71 = vsel %vm33, %v27, 0
    %v74 = vsel %vm33, %v28, 0
    %v77 = vsel %vm33, %v29, 0
    %v80 = vsel %vm33, %v30, 0
    %82 = vmatprep.subr.mxu0 %v32
    %83 = vmatpush1.msra.mxu0 %v31
    %84 = vmatprep.subr.mxu0 0.0
    %85 = vmatpush1.msra.mxu0 0.0
    %86 = vmatprep.subr.mxu0 0.0
    %87 = vmatpush1.msra.mxu0 0.0
    %88 = vmatprep.subr.mxu0 0.0
    %89 = vmatpush1.msra.mxu0 0.0
    %90 = vmatprep.subr.mxu0 0.0
    %91 = vmatpush1.msra.mxu0 0.0
    %92 = vmatprep.subr.mxu0 0.0
    %93 = vmatpush1.msra.mxu0 0.0
    %94 = vmatprep.subr.mxu0 0.0
    %95 = vmatpush1.msra.mxu0 0.0
    %96 = vmatprep.subr.mxu0 0.0
    %97 = vmatpush1.msra.mxu0 0.0
    %98 = vmatprep.subr.mxu0 0.0
    %99 = vmatpush1.msra.mxu0 0.0
    %100 = vmatprep.subr.mxu0 0.0
    %101 = vmatpush1.msra.mxu0 0.0
    %102 = vmatprep.subr.mxu0 0.0
    %103 = vmatpush1.msra.mxu0 0.0
    %104 = vmatprep.subr.mxu0 0.0
    %105 = vmatpush1.msra.mxu0 0.0
    %106 = vmatprep.subr.mxu0 0.0
    %107 = vmatpush1.msra.mxu0 0.0
    %108 = vmatprep.subr.mxu0 0.0
    %109 = vmatpush1.msra.mxu0 0.0
    %110 = vmatprep.subr.mxu0 0.0
    %111 = vmatpush1.msra.mxu0 0.0
    %112 = vmatprep.subr.mxu0 0.0
    %113 = vmatpush1.msra.mxu0 0.0
    %114 = vmatprep.subr.mxu0 0.0
    %115 = vmatpush1.msra.mxu0 0.0
    %116 = vmatprep.subr.mxu0 0.0
    %117 = vmatpush1.msra.mxu0 0.0
    %118 = vmatprep.subr.mxu0 0.0
    %119 = vmatpush1.msra.mxu0 0.0
    %120 = vmatprep.subr.mxu0 0.0
    %121 = vmatpush1.msra.mxu0 0.0
    %122 = vmatprep.subr.mxu0 0.0
    %123 = vmatpush1.msra.mxu0 0.0
    %124 = vmatprep.subr.mxu0 0.0
    %125 = vmatpush1.msra.mxu0 0.0
    %126 = vmatprep.subr.mxu0 0.0
    %127 = vmatpush1.msra.mxu0 0.0
    %128 = vmatprep.subr.mxu0 0.0
    %129 = vmatpush1.msra.mxu0 0.0
    %130 = vmatprep.subr.mxu0 0.0
    %131 = vmatpush1.msra.mxu0 0.0
    %132 = vmatprep.subr.mxu0 0.0
    %133 = vmatpush1.msra.mxu0 0.0
    %134 = vmatprep.subr.mxu0 0.0
    %135 = vmatpush1.msra.mxu0 0.0
    %136 = vmatprep.subr.mxu0 0.0
    %137 = vmatpush1.msra.mxu0 0.0
    %138 = vmatprep.subr.mxu0 0.0
    %139 = vmatpush1.msra.mxu0 0.0
    %140 = vmatprep.subr.mxu0 0.0
    %141 = vmatpush1.msra.mxu0 0.0
    %142 = vmatprep.subr.mxu0 0.0
    %143 = vmatpush1.msra.mxu0 0.0
    %144 = vmatprep.subr.mxu0 0.0
    %145 = vmatpush1.msra.mxu0 0.0
    %146 = vmatprep.mubr.f32.mxu0 0.0
    %147 = vmatmul.mubr.f32.gmra.mrb[0].mxu0 %v35
    %v148 = vpop.f32.mrb[0].mxu0
    %v149 = vadd.f32 0.0, %v148
    %v150 = vpop.f32.mrb[0].mxu0
    %v151 = vadd.f32 0.0, %v150
    %152 = vmatprep.mubr.f32.mxu0 0.0
    %153 = vmatmul.mubr.f32.gmra.mrb[0].mxu0 %v38
    %v154 = vpop.f32.mrb[0].mxu0
    %v155 = vadd.f32 0.0, %v154
    %v156 = vpop.f32.mrb[0].mxu0
    %v157 = vadd.f32 0.0, %v156
    %158 = vmatprep.mubr.f32.mxu0 0.0
    %159 = vmatmul.mubr.f32.gmra.mrb[0].mxu0 %v41
    %v160 = vpop.f32.mrb[0].mxu0
    %v161 = vadd.f32 0.0, %v160
    %v162 = vpop.f32.mrb[0].mxu0
    %v163 = vadd.f32 0.0, %v162
    %164 = vmatprep.mubr.f32.mxu0 0.0
    %165 = vmatmul.mubr.f32.gmra.mrb[0].mxu0 %v44
    %v166 = vpop.f32.mrb[0].mxu0
    %v167 = vadd.f32 0.0, %v166
    %v168 = vpop.f32.mrb[0].mxu0
    %v169 = vadd.f32 0.0, %v168
    %170 = vmatprep.mubr.f32.mxu0 0.0
    %171 = vmatmul.mubr.f32.gmra.mrb[0].mxu0 %v47
    %v172 = vpop.f32.mrb[0].mxu0
    %v173 = vadd.f32 0.0, %v172
    %v174 = vpop.f32.mrb[0].mxu0
    %v175 = vadd.f32 0.0, %v174
    %176 = vmatprep.mubr.f32.mxu0 0.0
    %177 = vmatmul.mubr.f32.gmra.mrb[0].mxu0 %v50
    %v178 = vpop.f32.mrb[0].mxu0
    %v179 = vadd.f32 0.0, %v178
    %v180 = vpop.f32.mrb[0].mxu0
    %v181 = vadd.f32 0.0, %v180
    %182 = vmatprep.mubr.f32.mxu0 0.0
    %183 = vmatmul.mubr.f32.gmra.mrb[0].mxu0 %v53
    %v184 = vpop.f32.mrb[0].mxu0
    %v185 = vadd.f32 0.0, %v184
    %v186 = vpop.f32.mrb[0].mxu0
    %v187 = vadd.f32 0.0, %v186
    %188 = vmatprep.mubr.f32.mxu0 0.0
    %189 = vmatmul.mubr.f32.gmra.mrb[0].mxu0 %v56
    %v190 = vpop.f32.mrb[0].mxu0
    %v191 = vadd.f32 0.0, %v190
    %v192 = vpop.f32.mrb[0].mxu0
    %v193 = vadd.f32 0.0, %v192
    %194 = vmatprep.mubr.f32.mxu0 0.0
    %195 = vmatmul.mubr.f32.gmra.mrb[0].mxu0 %v59
    %v196 = vpop.f32.mrb[0].mxu0
    %v197 = vadd.f32 0.0, %v196
    %v198 = vpop.f32.mrb[0].mxu0
    %v199 = vadd.f32 0.0, %v198
    %200 = vmatprep.mubr.f32.mxu0 0.0
    %201 = vmatmul.mubr.f32.gmra.mrb[0].mxu0 %v62
    %v202 = vpop.f32.mrb[0].mxu0
    %v203 = vadd.f32 0.0, %v202
    %v204 = vpop.f32.mrb[0].mxu0
    %v205 = vadd.f32 0.0, %v204
    %206 = vmatprep.mubr.f32.mxu0 0.0
    %207 = vmatmul.mubr.f32.gmra.mrb[0].mxu0 %v65
    %v208 = vpop.f32.mrb[0].mxu0
    %v209 = vadd.f32 0.0, %v208
    %v210 = vpop.f32.mrb[0].mxu0
    %v211 = vadd.f32 0.0, %v210
    %212 = vmatprep.mubr.f32.mxu0 0.0
    %213 = vmatmul.mubr.f32.gmra.mrb[0].mxu0 %v68
    %v214 = vpop.f32.mrb[0].mxu0
    %v215 = vadd.f32 0.0, %v214
    %v216 = vpop.f32.mrb[0].mxu0
    %v217 = vadd.f32 0.0, %v216
    %218 = vmatprep.mubr.f32.mxu0 0.0
    %219 = vmatmul.mubr.f32.gmra.mrb[0].mxu0 %v71
    %v220 = vpop.f32.mrb[0].mxu0
    %v221 = vadd.f32 0.0, %v220
    %v222 = vpop.f32.mrb[0].mxu0
    %v223 = vadd.f32 0.0, %v222
    %224 = vmatprep.mubr.f32.mxu0 0.0
    %225 = vmatmul.mubr.f32.gmra.mrb[0].mxu0 %v74
    %v226 = vpop.f32.mrb[0].mxu0
    %v227 = vadd.f32 0.0, %v226
    %v228 = vpop.f32.mrb[0].mxu0
    %v229 = vadd.f32 0.0, %v228
    %230 = vmatprep.mubr.f32.mxu0 0.0
    %231 = vmatmul.mubr.f32.gmra.mrb[0].mxu0 %v77
    %v232 = vpop.f32.mrb[0].mxu0
    %v233 = vadd.f32 0.0, %v232
    %v234 = vpop.f32.mrb[0].mxu0
    %v235 = vadd.f32 0.0, %v234
    %236 = vmatprep.mubr.f32.mxu0 0.0
    %237 = vmatmul.mubr.f32.gmra.mrb[0].mxu0 %v80
    %v238 = vpop.f32.mrb[0].mxu0
    %v239 = vadd.f32 0.0, %v238
    %v240 = vpop.f32.mrb[0].mxu0
    %v241 = vadd.f32 0.0, %v240
    %242 = vdwg.mxu0
    %243 = vst [vmem:[#allocation2] sm:$0xff] %v149
    %244 = vst [vmem:[#allocation2 + $0x8] sm:$0xff] %v155
    %245 = vst [vmem:[#allocation2 + $0x10] sm:$0xff] %v161
    %246 = vst [vmem:[#allocation2 + $0x18] sm:$0xff] %v167
    %247 = vst [vmem:[#allocation2 + $0x20] sm:$0xff] %v173
    %248 = vst [vmem:[#allocation2 + $0x28] sm:$0xff] %v179
    %249 = vst [vmem:[#allocation2 + $0x30] sm:$0xff] %v185
    %250 = vst [vmem:[#allocation2 + $0x38] sm:$0xff] %v191
    %251 = vst [vmem:[#allocation2 + $0x40] sm:$0xff] %v197
    %252 = vst [vmem:[#allocation2 + $0x48] sm:$0xff] %v203
    %253 = vst [vmem:[#allocation2 + $0x50] sm:$0xff] %v209
    %254 = vst [vmem:[#allocation2 + $0x58] sm:$0xff] %v215
    %255 = vst [vmem:[#allocation2 + $0x60] sm:$0xff] %v221
    %256 = vst [vmem:[#allocation2 + $0x68] sm:$0xff] %v227
    %257 = vst [vmem:[#allocation2 + $0x70] sm:$0xff] %v233
    %258 = vst [vmem:[#allocation2 + $0x78] sm:$0xff] %v239
    %259 = vst [vmem:[#allocation4] sm:$0xff] %v151
    %260 = vst [vmem:[#allocation4 + $0x8] sm:$0xff] %v157
    %261 = vst [vmem:[#allocation4 + $0x10] sm:$0xff] %v163
    %262 = vst [vmem:[#allocation4 + $0x18] sm:$0xff] %v169
    %263 = vst [vmem:[#allocation4 + $0x20] sm:$0xff] %v175
    %264 = vst [vmem:[#allocation4 + $0x28] sm:$0xff] %v181
    %265 = vst [vmem:[#allocation4 + $0x30] sm:$0xff] %v187
    %266 = vst [vmem:[#allocation4 + $0x38] sm:$0xff] %v193
    %267 = vst [vmem:[#allocation4 + $0x40] sm:$0xff] %v199
    %268 = vst [vmem:[#allocation4 + $0x48] sm:$0xff] %v205
    %269 = vst [vmem:[#allocation4 + $0x50] sm:$0xff] %v211
    %270 = vst [vmem:[#allocation4 + $0x58] sm:$0xff] %v217
    %271 = vst [vmem:[#allocation4 + $0x60] sm:$0xff] %v223
    %272 = vst [vmem:[#allocation4 + $0x68] sm:$0xff] %v229
    %273 = vst [vmem:[#allocation4 + $0x70] sm:$0xff] %v235
    %274 = vst [vmem:[#allocation4 + $0x78] sm:$0xff] %v241
    // Predicated region
    $region10: #{tpu_custom_call.1} parent=1 // pred_check
      _
    $region11: #{tpu_custom_call.1} parent=1 // pred_check_branch
      %276 = sbr.rel (0) target = $region13
    $region12: #{tpu_custom_call.1} parent=1 // pred_region
      %s278 = ssub.s32 2048, 2048
      %279 = vsyncadd [#allocation3], %s278
      %s280 = sshll.u32 [#allocation2], 4
      %s281 = int_to_ptr.vmem [resolvable:$true] %s280
      %286 = dma.vmem_to_hbm [thread:$0]  %s281, 2048, %s2, [#allocation3], 128, 128, 8
    $region13: #{tpu_custom_call.1} parent=1 // pred_fallthru
      _
    // Predicated region
    $region14: #{tpu_custom_call.1} parent=1 // pred_check
      _
    $region15: #{tpu_custom_call.1} parent=1 // pred_check_branch
      %288 = sbr.rel (0) target = $region17
    $region16: #{tpu_custom_call.1} parent=1 // pred_region
      %s290 = ssub.s32 2048, 2048
      %291 = vsyncadd [#allocation5], %s290
      %s292 = sshll.u32 [#allocation4], 4
      %s293 = int_to_ptr.vmem [resolvable:$true] %s292
      %298 = dma.vmem_to_hbm [thread:$0]  %s293, 2048, %s3, [#allocation5], 128, 128, 8
    $region17: #{tpu_custom_call.1} parent=1 // pred_fallthru
      _
    // Predicated region
    $region18: #{tpu_custom_call.1} parent=1 // pred_check
      _
    $region19: #{tpu_custom_call.1} parent=1 // pred_check_branch
      %300 = sbr.rel (0) target = $region21
    $region20: #{tpu_custom_call.1} parent=1 // pred_region
      %301 = dma.done [#allocation3], 2048
    $region21: #{tpu_custom_call.1} parent=1 // pred_fallthru
      _
    // Predicated region
    $region22: #{tpu_custom_call.1} parent=1 // pred_check
      _
    $region23: #{tpu_custom_call.1} parent=1 // pred_check_branch
      %303 = sbr.rel (0) target = $region25
    $region24: #{tpu_custom_call.1} parent=1 // pred_region
      %304 = dma.done [#allocation5], 2048
    $region25: #{tpu_custom_call.1} parent=1 // pred_fallthru
      _
    %305 = vsyncpa [#allocation3], 1
    %306 = vsyncpa [#allocation5], 1

</llo_original>
